<compile_context>
chip_gen: v5e
topology: v5e:2x2
jax: 0.10.0
libtpu: 0.0.40
codegen_flags: <defaults>
</compile_context>

<pallas_src>
import math

import jax
import jax.numpy as jnp
from jax.experimental import pallas as pl
from jax.experimental.pallas import tpu as pltpu


# -----------------------------------------------------------------------------
# Kernel: per batch-tile attention (scores -> relu -> softmax -> context)
# -----------------------------------------------------------------------------
def _attention_kernel(x_ref, w_ref, b_ref, ctx_ref, attn_ref):
    """x_ref: (TB, T, H), w_ref: (1, 1, H), b_ref: (1, 1),
    ctx_ref: (TB, 1, H), attn_ref: (TB, T, 1)."""
    x = x_ref[...]                                      # (TB, T, H)
    w = w_ref[...]                                      # (1, 1, H)
    bias = b_ref[0, 0]

    # scores = relu(x @ w^T + b): broadcast multiply + lane-reduce over H.
    s = jnp.sum(x * w, axis=2, keepdims=True) + bias    # (TB, T, 1)
    s = jnp.maximum(s, 0.0)                             # relu

    # softmax over the time axis (sublane reduction per sample).
    m = jnp.max(s, axis=1, keepdims=True)               # (TB, 1, 1)
    e = jnp.exp(s - m)                                  # EUP
    denom = jnp.sum(e, axis=1, keepdims=True)           # (TB, 1, 1)
    r = pl.reciprocal(denom, approx=True)               # EUP approx recip
    r = r * (2.0 - denom * r)                           # one Newton step -> f32 accuracy
    attn = e * r                                        # (TB, T, 1)
    attn_ref[...] = attn

    # context = sum_t attn * x (broadcast multiply + sublane reduce).
    ctx_ref[...] = jnp.sum(attn * x, axis=1, keepdims=True)   # (TB, 1, H)


# -----------------------------------------------------------------------------
# Wrapper: Attention.forward
# -----------------------------------------------------------------------------
def _pick_batch_tile(B, T, H, *, target_bytes=2 << 20, cap=512):
    """Largest batch tile whose x-slab stays ~2 MiB per pipeline buffer."""
    per_sample_bytes = max(T * H * 4, 1)
    return int(max(1, min(B, target_bytes // per_sample_bytes, cap)))


def attention_forward(x, w_attn, b_attn, *, batch_tile=None):
    """x: (B, T, H); w_attn: (1, H) (PyTorch Linear weight); b_attn: (1,).
    Returns (context (B, H), attn_weights (B, T, 1))."""
    B, T, H = x.shape
    x = x.astype(jnp.float32)
    w = w_attn.astype(jnp.float32).reshape(1, 1, H)
    b = b_attn.astype(jnp.float32).reshape(1, 1)

    TB = batch_tile if batch_tile is not None else _pick_batch_tile(B, T, H)
    TB = max(1, min(TB, B))
    Bp = pl.cdiv(B, TB) * TB
    if Bp != B:
        x = jnp.pad(x, ((0, Bp - B), (0, 0), (0, 0)))

    ctx3, attn = pl.pallas_call(
        _attention_kernel,
        out_shape=(jax.ShapeDtypeStruct((Bp, 1, H), jnp.float32),
                   jax.ShapeDtypeStruct((Bp, T, 1), jnp.float32)),
        grid_spec=pltpu.PrefetchScalarGridSpec(
            num_scalar_prefetch=0,
            grid=(Bp // TB,),
            in_specs=[pl.BlockSpec((TB, T, H), lambda i: (i, 0, 0)),
                      pl.BlockSpec((1, 1, H), lambda i: (0, 0, 0)),
                      pl.BlockSpec((1, 1), lambda i: (0, 0))],
            out_specs=(pl.BlockSpec((TB, 1, H), lambda i: (i, 0, 0)),
                       pl.BlockSpec((TB, T, 1), lambda i: (i, 0, 0)))),
        compiler_params=pltpu.CompilerParams(
            dimension_semantics=("parallel",)),
    )(x, w, b)

    context = ctx3.reshape(Bp, H)[:B]        # cheap squeeze + slice (B*H floats)
    return context, attn[:B]


# -----------------------------------------------------------------------------
# Pure-JAX reference for correctness checking
# -----------------------------------------------------------------------------
def reference_forward(x, w_attn, b_attn):
    scores = jnp.einsum("bth,oh->bto", x, w_attn) + b_attn            # (B, T, 1)
    attn = jax.nn.softmax(jnp.maximum(scores, 0.0), axis=1)           # over T
    context = jnp.sum(attn * x, axis=1)                               # (B, H)
    return context, attn


if __name__ == "__main__":
    key = jax.random.PRNGKey(0)

    def run_case(B, T, H, kx, kw, kb, batch_tile=None):
        x = jax.random.normal(kx, (B, T, H), jnp.float32)
        bound = 1.0 / math.sqrt(H)
        w_attn = jax.random.uniform(kw, (1, H), jnp.float32, -bound, bound)
        b_attn = jax.random.uniform(kb, (1,), jnp.float32, -bound, bound)

        ctx, attn = jax.block_until_ready(
            attention_forward(x, w_attn, b_attn, batch_tile=batch_tile))
        ref_ctx, ref_attn = reference_forward(x, w_attn, b_attn)

        assert ctx.shape == (B, H), ctx.shape
        assert attn.shape == (B, T, 1), attn.shape
        assert jnp.allclose(ctx, ref_ctx, atol=1e-4, rtol=1e-4)
        assert jnp.allclose(attn, ref_attn, atol=1e-4, rtol=1e-4)

    k = jax.random.split(key, 6)
    # Small canonical shape.
    run_case(2, 8, 32, k[0], k[1], k[2])
    # Ragged batch to exercise padding + multiple (parallel) grid steps.
    run_case(37, 16, 128, k[3], k[4], k[5], batch_tile=8)

    print("KERNEL_OK")
</pallas_src>

<mosaic_0001>
module attributes {stable_mosaic.version = 11 : i64} {
  func.func @_attention_kernel(%arg0: i32, %arg1: memref<2x8x32xf32, #tpu.memory_space<vmem>>, %arg2: memref<1x1x32xf32, #tpu.memory_space<vmem>>, %arg3: memref<1x1xf32, #tpu.memory_space<vmem>>, %arg4: memref<2x1x32xf32, #tpu.memory_space<vmem>>, %arg5: memref<2x8x1xf32, #tpu.memory_space<vmem>>) attributes {dimension_semantics = [#tpu.dimension_semantics<parallel>], iteration_bounds = array<i64: 1>, scalar_prefetch = 0 : i64, scratch_operands = 0 : i64, tpu.core_type = #tpu.core_type<tc>, window_params = [{transform_indices = @transform_0, window_bounds = array<i64: 2, 8, 32>}, {pipeline_mode = #tpu.pipeline_mode<synchronous>, transform_indices = @transform_1, window_bounds = array<i64: 1, 1, 32>}, {pipeline_mode = #tpu.pipeline_mode<synchronous>, transform_indices = @transform_2, window_bounds = array<i64: 1, 1>}, {transform_indices = @transform_3, window_bounds = array<i64: 2, 1, 32>}, {transform_indices = @transform_4, window_bounds = array<i64: 2, 8, 1>}]} {
    %c0 = arith.constant 0 : index
    %c0_0 = arith.constant 0 : index
    %c0_1 = arith.constant 0 : index
    %0 = vector.load %arg1[%c0, %c0_0, %c0_1] : memref<2x8x32xf32, #tpu.memory_space<vmem>>, vector<2x8x32xf32>
    %c0_2 = arith.constant 0 : index
    %c0_3 = arith.constant 0 : index
    %c0_4 = arith.constant 0 : index
    %1 = vector.load %arg2[%c0_2, %c0_3, %c0_4] : memref<1x1x32xf32, #tpu.memory_space<vmem>>, vector<1x1x32xf32>
    %c0_5 = arith.constant 0 : index
    %c0_6 = arith.constant 0 : index
    %2 = vector.load %arg3[%c0_5, %c0_6] : memref<1x1xf32, #tpu.memory_space<vmem>>, vector<1x1xf32>
    %3 = vector.extract %2[0, 0] : f32 from vector<1x1xf32>
    %4 = vector.broadcast %1 : vector<1x1x32xf32> to vector<2x8x32xf32>
    %5 = arith.mulf %0, %4 : vector<2x8x32xf32>
    %cst = arith.constant dense<0.000000e+00> : vector<2x8xf32>
    %6 = vector.multi_reduction <add>, %5, %cst [2] : vector<2x8x32xf32> to vector<2x8xf32>
    %7 = vector.shape_cast %6 : vector<2x8xf32> to vector<2x8x1xf32>
    %8 = vector.broadcast %3 : f32 to vector<2x8x1xf32>
    %9 = arith.addf %7, %8 : vector<2x8x1xf32>
    %cst_7 = arith.constant 0.000000e+00 : f32
    %10 = vector.broadcast %cst_7 : f32 to vector<2x8x1xf32>
    %11 = arith.maximumf %9, %10 : vector<2x8x1xf32>
    %cst_8 = arith.constant dense<0xFF800000> : vector<2x1xf32>
    %12 = vector.multi_reduction <maximumf>, %11, %cst_8 [1] : vector<2x8x1xf32> to vector<2x1xf32>
    %13 = vector.shape_cast %12 : vector<2x1xf32> to vector<2x1x1xf32>
    %14 = vector.broadcast %13 : vector<2x1x1xf32> to vector<2x8x1xf32>
    %15 = arith.subf %11, %14 : vector<2x8x1xf32>
    %16 = math.exp %15 : vector<2x8x1xf32>
    %cst_9 = arith.constant dense<0.000000e+00> : vector<2x1xf32>
    %17 = vector.multi_reduction <add>, %16, %cst_9 [1] : vector<2x8x1xf32> to vector<2x1xf32>
    %18 = vector.shape_cast %17 : vector<2x1xf32> to vector<2x1x1xf32>
    %19 = tpu.reciprocal %18 {approx = true} : vector<2x1x1xf32> -> vector<2x1x1xf32>
    %20 = arith.mulf %18, %19 : vector<2x1x1xf32>
    %cst_10 = arith.constant 2.000000e+00 : f32
    %21 = vector.broadcast %cst_10 : f32 to vector<2x1x1xf32>
    %22 = arith.subf %21, %20 : vector<2x1x1xf32>
    %23 = arith.mulf %19, %22 : vector<2x1x1xf32>
    %24 = vector.broadcast %23 : vector<2x1x1xf32> to vector<2x8x1xf32>
    %25 = arith.mulf %16, %24 : vector<2x8x1xf32>
    %c0_11 = arith.constant 0 : index
    %c0_12 = arith.constant 0 : index
    %c0_13 = arith.constant 0 : index
    %26 = vector.load %arg5[%c0_11, %c0_12, %c0_13] : memref<2x8x1xf32, #tpu.memory_space<vmem>>, vector<2x8x1xf32>
    tpu.vector_store %arg5[%c0_11, %c0_12, %c0_13], %25 {strides = array<i32>} : memref<2x8x1xf32, #tpu.memory_space<vmem>>, vector<2x8x1xf32>,
    %27 = vector.broadcast %25 : vector<2x8x1xf32> to vector<2x8x32xf32>
    %28 = arith.mulf %27, %0 : vector<2x8x32xf32>
    %cst_14 = arith.constant dense<0.000000e+00> : vector<2x32xf32>
    %29 = vector.multi_reduction <add>, %28, %cst_14 [1] : vector<2x8x32xf32> to vector<2x32xf32>
    %30 = vector.shape_cast %29 : vector<2x32xf32> to vector<2x1x32xf32>
    %c0_15 = arith.constant 0 : index
    %c0_16 = arith.constant 0 : index
    %c0_17 = arith.constant 0 : index
    %31 = vector.load %arg4[%c0_15, %c0_16, %c0_17] : memref<2x1x32xf32, #tpu.memory_space<vmem>>, vector<2x1x32xf32>
    tpu.vector_store %arg4[%c0_15, %c0_16, %c0_17], %30 {strides = array<i32>} : memref<2x1x32xf32, #tpu.memory_space<vmem>>, vector<2x1x32xf32>,
    return
  }
  func.func @transform_0(%arg0: i32) -> (i32, i32, i32) {
    %c0_i32 = arith.constant 0 : i32
    %c0_i32_0 = arith.constant 0 : i32
    %c0_i32_1 = arith.constant 0 : i32
    return %arg0, %c0_i32, %c0_i32_0 : i32, i32, i32
  }
  func.func @transform_1(%arg0: i32) -> (i32, i32, i32) {
    %c0_i32 = arith.constant 0 : i32
    %c0_i32_0 = arith.constant 0 : i32
    %c0_i32_1 = arith.constant 0 : i32
    %c0_i32_2 = arith.constant 0 : i32
    return %c0_i32, %c0_i32_0, %c0_i32_1 : i32, i32, i32
  }
  func.func @transform_2(%arg0: i32) -> (i32, i32) {
    %c0_i32 = arith.constant 0 : i32
    %c0_i32_0 = arith.constant 0 : i32
    %c0_i32_1 = arith.constant 0 : i32
    return %c0_i32, %c0_i32_0 : i32, i32
  }
  func.func @transform_3(%arg0: i32) -> (i32, i32, i32) {
    %c0_i32 = arith.constant 0 : i32
    %c0_i32_0 = arith.constant 0 : i32
    %c0_i32_1 = arith.constant 0 : i32
    return %arg0, %c0_i32, %c0_i32_0 : i32, i32, i32
  }
  func.func @transform_4(%arg0: i32) -> (i32, i32, i32) {
    %c0_i32 = arith.constant 0 : i32
    %c0_i32_0 = arith.constant 0 : i32
    %c0_i32_1 = arith.constant 0 : i32
    return %arg0, %c0_i32, %c0_i32_0 : i32, i32, i32
  }
}

</mosaic_0001>

<llo_original>
// kernel: tpu_custom_call.1
$region0: #{tpu_custom_call.1}
  #allocation0 [shape = 'u32[]', space=smem, size = 0x4, offset = 0x4, fixed_abs, tag = 'smem constant byte address 0x4 - core index']
  #allocation1 [shape = 'u32[72,128]{1,0:T(1,128)}', space=vmem, size = 0x9000, scoped, tag = 'internal scratch']
  #allocation2 [shape = 'f32[1,1]{1,0:T(1,128)S(1)}', space=vmem, size = 0x200, scoped, tag = 'scoped memory for tpu_custom_call.1']
  %s0 = inlined_call_operand.hbm [shape: f32[2,8,32], index: 0, kind: input, shape index: {}]
  %s1 = inlined_call_operand.vmem [shape: f32[1,1,32], index: 1, kind: input, shape index: {}]
  %s2 = inlined_call_operand.<no memory space> [shape: f32[1,1], index: 2, kind: input, shape index: {}]
  %s3 = inlined_call_operand.hbm [shape: f32[2,1,32], index: 3, kind: output, shape index: {0}]
  %s4 = inlined_call_operand.vmem [shape: f32[2,8,1], index: 4, kind: output, shape index: {1}]
  %5 = xla_tuple %s3, %s4
  %s6 = sld [smem:[#allocation0]]
  $region34: #{tpu_custom_call.1} parent=0
    _
  %s8 = ssub.s32 1, %s6
  %s9 = scalar_select 0, %s8, %s6
  %v10 = vstv %s2
  %11 = vst [vmem:[#allocation2] sm:$0x1] %v10
  $region1: #{tpu_custom_call.1} parent=0
    #allocation3 [shape = 'u8[8192]{0}', space=vmem, size = 0x2000, scoped, tag = 'input window, operand 0, single buffered']
    #allocation4 [shape = 's32[1]{0}', space=sflag, size = 0x4, scoped, tag = 'scoped memory for tpu_custom_call.1']
    #allocation5 [shape = 's32[1]{0}', space=sflag, size = 0x4, scoped, tag = 'scoped memory for tpu_custom_call.1']
    #allocation6 [shape = 'u8[1024]{0}', space=vmem, size = 0x400, scoped, tag = 'output window, operand 0, single buffered']
    %12 = vsyncpa [#allocation4], 0
    %13 = vsyncpa [#allocation5], 0
    // Predicated region
    $region2: #{tpu_custom_call.1} parent=1 // pred_check
      _
    $region3: #{tpu_custom_call.1} parent=1 // pred_check_branch
      %15 = sbr.rel (0) target = $region5
    $region4: #{tpu_custom_call.1} parent=1 // pred_region
      %17 = vsyncadd [#allocation4], 0
      %s18 = sshll.u32 %s0, 4
      %s19 = int_to_ptr.hbm [resolvable:$true] %s18
      %s20 = sshll.u32 [#allocation3], 4
      %s21 = int_to_ptr.vmem [resolvable:$true] %s20
      %26 = dma.hbm_to_vmem [thread:$0]  %s19, 256, %s21, [#allocation4], 128, 128, 8
    $region5: #{tpu_custom_call.1} parent=1 // pred_fallthru
      _
    // Predicated region
    $region6: #{tpu_custom_call.1} parent=1 // pred_check
      _
    $region7: #{tpu_custom_call.1} parent=1 // pred_check_branch
      %28 = sbr.rel (0) target = $region9
    $region8: #{tpu_custom_call.1} parent=1 // pred_region
      _
    $region9: #{tpu_custom_call.1} parent=1 // pred_fallthru
      _
    // Predicated region
    $region10: #{tpu_custom_call.1} parent=1 // pred_check
      _
    $region11: #{tpu_custom_call.1} parent=1 // pred_check_branch
      %30 = sbr.rel (0) target = $region13
    $region12: #{tpu_custom_call.1} parent=1 // pred_region
      _
    $region13: #{tpu_custom_call.1} parent=1 // pred_fallthru
      _
    // Predicated region
    $region14: #{tpu_custom_call.1} parent=1 // pred_check
      _
    $region15: #{tpu_custom_call.1} parent=1 // pred_check_branch
      %32 = sbr.rel (0) target = $region17
    $region16: #{tpu_custom_call.1} parent=1 // pred_region
      %34 = dma.done [#allocation4], 256
    $region17: #{tpu_custom_call.1} parent=1 // pred_fallthru
      _
    %v35 = vld [vmem:[#allocation3] sm:$0xff]
    %v36 = vld [vmem:[#allocation3 + $0x8] sm:$0xff]
    %v37 = vld [vmem:[%s1] sm:$0x1]
    %v38 = vld [vmem:[#allocation2] sm:$0x1]
    %s39 = vtos %v38
    %v41 = vperm.slane %v37, 0
    %v43 = vmul.f32 %v35, %v41
    %v44 = vmul.f32 %v36, %v41
    %vm45 = vcmask 261120
    %v46 = vsel %vm45, %v43, 0.0
    %47 = vadd.xlane.f32.xlu0 %v46
    %v48 = vpop.xlane.xlu0 %47
    %v49 = vsel %vm45, %v44, 0.0
    %50 = vadd.xlane.f32.xlu0 %v49
    %v51 = vpop.xlane.xlu0 %50
    %v52 = vstv %s39
    %v53 = vadd.f32 %v48, %v52
    %v54 = vadd.f32 %v51, %v52
    %v55 = vmax.f32 %v53, 0.0
    %v56 = vmax.f32 %v54, 0.0
    %v57 = vrot.slane %v55, 4
    %v58 = vmax.f32 %v55, %v57
    %v59 = vrot.slane %v58, 2
    %v60 = vmax.f32 %v58, %v59
    %v61 = vrot.slane %v60, 1
    %v62 = vmax.f32 %v60, %v61
    %v63 = vrot.slane %v56, 4
    %v64 = vmax.f32 %v56, %v63
    %v65 = vrot.slane %v64, 2
    %v66 = vmax.f32 %v64, %v65
    %v67 = vrot.slane %v66, 1
    %v68 = vmax.f32 %v66, %v67
    %v69 = vsub.f32 %v55, %v62
    %v70 = vsub.f32 %v56, %v68
    %v71 = vmul.f32 %v69, 1.442695
    %v72 = vpow.pop %v71
    %v73 = vmul.f32 %v70, 1.442695
    %v74 = vpow.pop %v73
    %v75 = vrot.slane %v72, 4
    %v76 = vadd.f32 %v72, %v75
    %v77 = vrot.slane %v76, 2
    %v78 = vadd.f32 %v76, %v77
    %v79 = vrot.slane %v78, 1
    %v80 = vadd.f32 %v78, %v79
    %v81 = vrot.slane %v74, 4
    %v82 = vadd.f32 %v74, %v81
    %v83 = vrot.slane %v82, 2
    %v84 = vadd.f32 %v82, %v83
    %v85 = vrot.slane %v84, 1
    %v86 = vadd.f32 %v84, %v85
    %v87 = vrcp.pop %v80
    %v88 = vrcp.pop %v86
    %v89 = vmul.f32 %v80, %v87
    %v90 = vmul.f32 %v86, %v88
    %v91 = vsub.f32 2.0, %v89
    %v92 = vsub.f32 2.0, %v90
    %v93 = vmul.f32 %v87, %v91
    %v94 = vmul.f32 %v88, %v92
    %v95 = vmul.f32 %v72, %v93
    %v96 = vmul.f32 %v74, %v94
    %vm97 = vcmask 7168
    %98 = vst.msk [vmem:[%s4] sm:$0xff] %vm97, %v95
    %99 = vst.msk [vmem:[%s4 + $0x8] sm:$0xff] %vm97, %v96
    %v100 = vmul.f32 %v95, %v35
    %v101 = vmul.f32 %v96, %v36
    %v102 = vsel %vm45, %v100, 0.0
    %v103 = vrot.slane %v102, 4
    %v104 = vadd.f32 %v102, %v103
    %v105 = vrot.slane %v104, 2
    %v106 = vadd.f32 %v104, %v105
    %v107 = vrot.slane %v106, 1
    %v108 = vadd.f32 %v106, %v107
    %v109 = vsel %vm45, %v101, 0.0
    %v110 = vrot.slane %v109, 4
    %v111 = vadd.f32 %v109, %v110
    %v112 = vrot.slane %v111, 2
    %v113 = vadd.f32 %v111, %v112
    %v114 = vrot.slane %v113, 1
    %v115 = vadd.f32 %v113, %v114
    %vm116 = vcmask 253952
    %117 = vst.msk [vmem:[#allocation6] sm:$0x1] %vm116, %v108
    %118 = vst.msk [vmem:[#allocation6 + $0x1] sm:$0x1] %vm116, %v115
    // Predicated region
    $region18: #{tpu_custom_call.1} parent=1 // pred_check
      _
    $region19: #{tpu_custom_call.1} parent=1 // pred_check_branch
      %120 = sbr.rel (0) target = $region21
    $region20: #{tpu_custom_call.1} parent=1 // pred_region
      %122 = vsyncadd [#allocation5], 0
      %s123 = sshll.u32 [#allocation6], 4
      %s124 = int_to_ptr.vmem [resolvable:$true] %s123
      %s125 = sshll.u32 %s3, 4
      %s126 = int_to_ptr.hbm [resolvable:$true] %s125
      %131 = dma.vmem_to_hbm [thread:$0]  %s124, 32, %s126, [#allocation5], 16, 16, 1
    $region21: #{tpu_custom_call.1} parent=1 // pred_fallthru
      _
    // Predicated region
    $region22: #{tpu_custom_call.1} parent=1 // pred_check
      _
    $region23: #{tpu_custom_call.1} parent=1 // pred_check_branch
      %133 = sbr.rel (0) target = $region25
    $region24: #{tpu_custom_call.1} parent=1 // pred_region
      _
    $region25: #{tpu_custom_call.1} parent=1 // pred_fallthru
      _
    // Predicated region
    $region26: #{tpu_custom_call.1} parent=1 // pred_check
      _
    $region27: #{tpu_custom_call.1} parent=1 // pred_check_branch
      %135 = sbr.rel (0) target = $region29
    $region28: #{tpu_custom_call.1} parent=1 // pred_region
      %137 = dma.done [#allocation5], 32
    $region29: #{tpu_custom_call.1} parent=1 // pred_fallthru
      _
    // Predicated region
    $region30: #{tpu_custom_call.1} parent=1 // pred_check
      _
    $region31: #{tpu_custom_call.1} parent=1 // pred_check_branch
      %139 = sbr.rel (0) target = $region33
    $region32: #{tpu_custom_call.1} parent=1 // pred_region
      _
    $region33: #{tpu_custom_call.1} parent=1 // pred_fallthru
      _
    %140 = vsyncpa [#allocation4], 1
    %141 = vsyncpa [#allocation5], 1

</llo_original>
